<compile_context>
chip_gen: v5e
topology: v5e:2x2
jax: 0.10.0
libtpu: 0.0.40
codegen_flags: <defaults>
</compile_context>

<pallas_src>
import math
from dataclasses import dataclass, field

import jax
import jax.numpy as jnp
from jax.experimental import pallas as pl
from jax.experimental.pallas import tpu as pltpu


@dataclass
class Phi3Config:
    max_position_embeddings: int = 4096
    original_max_position_embeddings: int = 2048
    rope_theta: float = 10000.0
    rope_scaling: dict = field(default_factory=dict)


def _round_up(x: int, m: int) -> int:
    return (x + m - 1) // m * m


def _make_yarn_kernel(scaling_factor: float, half: int):
    def kernel(pos_ref, invf_ref, cos_ref, sin_ref):
        # pos_ref:  (TS, 1)    int32   (row tile of flattened B*S position ids)
        # invf_ref: (1, half)  float32
        # cos_ref / sin_ref: (TS, dim) in the output dtype, dim == 2 * half
        pos = pos_ref[...].astype(jnp.float32)            # (TS, 1)
        invf = invf_ref[...]                              # (1, half)
        freqs = pos * invf                                 # (TS, half)  VPU broadcast mul
        c = (jnp.cos(freqs) * scaling_factor).astype(cos_ref.dtype)
        s = (jnp.sin(freqs) * scaling_factor).astype(sin_ref.dtype)
        # emb = cat(freqs, freqs): duplicate at the store instead of recomputing
        cos_ref[:, :half] = c
        cos_ref[:, half:] = c
        sin_ref[:, :half] = s
        sin_ref[:, half:] = s

    return kernel


def phi3_yarn_rotary_embedding(x, position_ids, dim, config: Phi3Config,
                               max_row_tile: int = 1024):
    """Returns (cos, sin), each of shape (B, S, dim), dtype = x.dtype."""
    B, S = position_ids.shape
    half = dim // 2
    base = config.rope_theta

    # --- plain-JAX glue: global short/long switch + tiny inv_freq vector ---
    seq_len = jnp.max(position_ids) + 1
    short_f = jnp.asarray(config.rope_scaling["short_factor"], dtype=jnp.float32)
    long_f = jnp.asarray(config.rope_scaling["long_factor"], dtype=jnp.float32)
    ext_factors = jnp.where(
        seq_len > config.original_max_position_embeddings, long_f, short_f)
    inv_freq_shape = jnp.arange(0, dim, 2, dtype=jnp.float32) / dim
    inv_freq = (1.0 / (ext_factors * (base ** inv_freq_shape))).reshape(1, half)

    scale = config.max_position_embeddings / config.original_max_position_embeddings
    scaling_factor = 1.0 if scale <= 1.0 else 0.1 * math.log(scale) + 1.0

    # --- flatten over B*S and tile the row axis (sublane-aligned) ---
    BS = B * S
    TS = min(max_row_tile, _round_up(BS, 8))   # row tile, multiple of 8
    R = _round_up(BS, TS)                      # padded row count
    pos_flat = position_ids.reshape(BS).astype(jnp.int32)
    if R != BS:
        pos_flat = jnp.pad(pos_flat, (0, R - BS))
    pos_rows = pos_flat.reshape(R, 1)

    kernel = _make_yarn_kernel(float(scaling_factor), half)

    cos_rows, sin_rows = pl.pallas_call(
        kernel,
        out_shape=(
            jax.ShapeDtypeStruct((R, dim), x.dtype),
            jax.ShapeDtypeStruct((R, dim), x.dtype),
        ),
        grid_spec=pltpu.PrefetchScalarGridSpec(
            num_scalar_prefetch=0,
            grid=(R // TS,),
            in_specs=[
                pl.BlockSpec((TS, 1), lambda i: (i, 0)),
                pl.BlockSpec((1, half), lambda i: (0, 0)),
            ],
            out_specs=[
                pl.BlockSpec((TS, dim), lambda i: (i, 0)),
                pl.BlockSpec((TS, dim), lambda i: (i, 0)),
            ],
        ),
        compiler_params=pltpu.CompilerParams(
            dimension_semantics=("parallel",),
        ),
    )(pos_rows, inv_freq)

    if R != BS:
        cos_rows = cos_rows[:BS]
        sin_rows = sin_rows[:BS]
    return cos_rows.reshape(B, S, dim), sin_rows.reshape(B, S, dim)


def _reference(x, position_ids, dim, config: Phi3Config):
    """Plain-JAX reference mirroring the PyTorch forward."""
    seq_len = jnp.max(position_ids) + 1
    short_f = jnp.asarray(config.rope_scaling["short_factor"], dtype=jnp.float32)
    long_f = jnp.asarray(config.rope_scaling["long_factor"], dtype=jnp.float32)
    ext_factors = jnp.where(
        seq_len > config.original_max_position_embeddings, long_f, short_f)
    inv_freq_shape = jnp.arange(0, dim, 2, dtype=jnp.float32) / dim
    inv_freq = 1.0 / (ext_factors * (config.rope_theta ** inv_freq_shape))
    freqs = inv_freq[None, :, None] * position_ids[:, None, :].astype(jnp.float32)  # (B, half, S)
    freqs = jnp.transpose(freqs, (0, 2, 1))                                          # (B, S, half)
    emb = jnp.concatenate([freqs, freqs], axis=-1)
    scale = config.max_position_embeddings / config.original_max_position_embeddings
    scaling_factor = 1.0 if scale <= 1.0 else 0.1 * math.log(scale) + 1.0
    return (jnp.cos(emb) * scaling_factor).astype(x.dtype), \
           (jnp.sin(emb) * scaling_factor).astype(x.dtype)


if __name__ == "__main__":
    B, S, dim = 2, 8, 32
    half = dim // 2

    config = Phi3Config(
        max_position_embeddings=4096,
        original_max_position_embeddings=2048,
        rope_theta=10000.0,
        rope_scaling={
            # deterministic synthetic yarn factors (length = dim // 2)
            "short_factor": [1.0 + 0.05 * i for i in range(half)],
            "long_factor": [1.5 + 0.10 * i for i in range(half)],
        },
    )

    key = jax.random.PRNGKey(0)
    kx, kp = jax.random.split(key)
    x = jax.random.normal(kx, (B, S, dim), dtype=jnp.float32)
    position_ids = jax.random.randint(kp, (B, S), 0, 3000, dtype=jnp.int32)

    cos, sin = phi3_yarn_rotary_embedding(x, position_ids, dim, config)
    cos = jax.block_until_ready(cos)
    sin = jax.block_until_ready(sin)

    cos_ref, sin_ref = _reference(x, position_ids, dim, config)
    assert cos.shape == (B, S, dim) and sin.shape == (B, S, dim)
    assert cos.dtype == x.dtype and sin.dtype == x.dtype
    assert jnp.allclose(cos, cos_ref, atol=1e-5, rtol=1e-5)
    assert jnp.allclose(sin, sin_ref, atol=1e-5, rtol=1e-5)

    print("KERNEL_OK")
</pallas_src>

<mosaic_0001>
module attributes {stable_mosaic.version = 11 : i64} {
  func.func @kernel(%arg0: i32, %arg1: memref<16x1xi32, #tpu.memory_space<vmem>>, %arg2: memref<1x16xf32, #tpu.memory_space<vmem>>, %arg3: memref<16x32xf32, #tpu.memory_space<vmem>>, %arg4: memref<16x32xf32, #tpu.memory_space<vmem>>) attributes {dimension_semantics = [#tpu.dimension_semantics<parallel>], iteration_bounds = array<i64: 1>, scalar_prefetch = 0 : i64, scratch_operands = 0 : i64, tpu.core_type = #tpu.core_type<tc>, window_params = [{transform_indices = @transform_0, window_bounds = array<i64: 16, 1>}, {pipeline_mode = #tpu.pipeline_mode<synchronous>, transform_indices = @transform_1, window_bounds = array<i64: 1, 16>}, {transform_indices = @transform_2, window_bounds = array<i64: 16, 32>}, {transform_indices = @transform_3, window_bounds = array<i64: 16, 32>}]} {
    %c0 = arith.constant 0 : index
    %c0_0 = arith.constant 0 : index
    %0 = vector.load %arg1[%c0, %c0_0] : memref<16x1xi32, #tpu.memory_space<vmem>>, vector<16x1xi32>
    %1 = arith.sitofp %0 : vector<16x1xi32> to vector<16x1xf32>
    %c0_1 = arith.constant 0 : index
    %c0_2 = arith.constant 0 : index
    %2 = vector.load %arg2[%c0_1, %c0_2] : memref<1x16xf32, #tpu.memory_space<vmem>>, vector<1x16xf32>
    %3 = vector.broadcast %1 : vector<16x1xf32> to vector<16x16xf32>
    %4 = vector.broadcast %2 : vector<1x16xf32> to vector<16x16xf32>
    %5 = arith.mulf %3, %4 : vector<16x16xf32>
    %6 = math.cos %5 : vector<16x16xf32>
    %cst = arith.constant 1.06931472 : f32
    %7 = vector.broadcast %cst : f32 to vector<16x16xf32>
    %8 = arith.mulf %6, %7 : vector<16x16xf32>
    %9 = math.sin %5 : vector<16x16xf32>
    %cst_3 = arith.constant 1.06931472 : f32
    %10 = vector.broadcast %cst_3 : f32 to vector<16x16xf32>
    %11 = arith.mulf %9, %10 : vector<16x16xf32>
    %c0_4 = arith.constant 0 : index
    %c0_5 = arith.constant 0 : index
    %12 = vector.load %arg3[%c0_4, %c0_5] : memref<16x32xf32, #tpu.memory_space<vmem>>, vector<16x16xf32>
    tpu.vector_store %arg3[%c0_4, %c0_5], %8 {strides = array<i32>} : memref<16x32xf32, #tpu.memory_space<vmem>>, vector<16x16xf32>,
    %c0_6 = arith.constant 0 : index
    %c16 = arith.constant 16 : index
    %13 = vector.load %arg3[%c0_6, %c16] : memref<16x32xf32, #tpu.memory_space<vmem>>, vector<16x16xf32>
    tpu.vector_store %arg3[%c0_6, %c16], %8 {strides = array<i32>} : memref<16x32xf32, #tpu.memory_space<vmem>>, vector<16x16xf32>,
    %c0_7 = arith.constant 0 : index
    %c0_8 = arith.constant 0 : index
    %14 = vector.load %arg4[%c0_7, %c0_8] : memref<16x32xf32, #tpu.memory_space<vmem>>, vector<16x16xf32>
    tpu.vector_store %arg4[%c0_7, %c0_8], %11 {strides = array<i32>} : memref<16x32xf32, #tpu.memory_space<vmem>>, vector<16x16xf32>,
    %c0_9 = arith.constant 0 : index
    %c16_10 = arith.constant 16 : index
    %15 = vector.load %arg4[%c0_9, %c16_10] : memref<16x32xf32, #tpu.memory_space<vmem>>, vector<16x16xf32>
    tpu.vector_store %arg4[%c0_9, %c16_10], %11 {strides = array<i32>} : memref<16x32xf32, #tpu.memory_space<vmem>>, vector<16x16xf32>,
    return
  }
  func.func @transform_0(%arg0: i32) -> (i32, i32) {
    %c0_i32 = arith.constant 0 : i32
    %c0_i32_0 = arith.constant 0 : i32
    return %arg0, %c0_i32 : i32, i32
  }
  func.func @transform_1(%arg0: i32) -> (i32, i32) {
    %c0_i32 = arith.constant 0 : i32
    %c0_i32_0 = arith.constant 0 : i32
    %c0_i32_1 = arith.constant 0 : i32
    return %c0_i32, %c0_i32_0 : i32, i32
  }
  func.func @transform_2(%arg0: i32) -> (i32, i32) {
    %c0_i32 = arith.constant 0 : i32
    %c0_i32_0 = arith.constant 0 : i32
    return %arg0, %c0_i32 : i32, i32
  }
  func.func @transform_3(%arg0: i32) -> (i32, i32) {
    %c0_i32 = arith.constant 0 : i32
    %c0_i32_0 = arith.constant 0 : i32
    return %arg0, %c0_i32 : i32, i32
  }
}

</mosaic_0001>

<llo_original>
// kernel: tpu_custom_call.1
$region0: #{tpu_custom_call.1}
  #allocation0 [shape = 'u32[]', space=smem, size = 0x4, offset = 0x4, fixed_abs, tag = 'smem constant byte address 0x4 - core index']
  #allocation1 [shape = 'u32[72,128]{1,0:T(1,128)}', space=vmem, size = 0x9000, scoped, tag = 'internal scratch']
  %s0 = inlined_call_operand.vmem [shape: s32[16,1], index: 0, kind: input, shape index: {}]
  %s1 = inlined_call_operand.vmem [shape: f32[1,16], index: 1, kind: input, shape index: {}]
  %s2 = inlined_call_operand.hbm [shape: f32[16,32], index: 2, kind: output, shape index: {0}]
  %s3 = inlined_call_operand.hbm [shape: f32[16,32], index: 3, kind: output, shape index: {1}]
  %4 = xla_tuple %s2, %s3
  %s5 = sld [smem:[#allocation0]]
  $region26: #{tpu_custom_call.1} parent=0
    _
  %s7 = ssub.s32 1, %s5
  %s8 = scalar_select 0, %s7, %s5
  $region1: #{tpu_custom_call.1} parent=0
    #allocation2 [shape = 'u8[8192]{0}', space=vmem, size = 0x2000, scoped, tag = 'output window, operand 0, single buffered']
    #allocation3 [shape = 's32[1]{0}', space=sflag, size = 0x4, scoped, tag = 'scoped memory for tpu_custom_call.1']
    #allocation4 [shape = 'u8[8192]{0}', space=vmem, size = 0x2000, scoped, tag = 'output window, operand 1, single buffered']
    #allocation5 [shape = 's32[1]{0}', space=sflag, size = 0x4, scoped, tag = 'scoped memory for tpu_custom_call.1']
    %9 = vsyncpa [#allocation3], 0
    %10 = vsyncpa [#allocation5], 0
    // Predicated region
    $region2: #{tpu_custom_call.1} parent=1 // pred_check
      _
    $region3: #{tpu_custom_call.1} parent=1 // pred_check_branch
      %12 = sbr.rel (0) target = $region5
    $region4: #{tpu_custom_call.1} parent=1 // pred_region
      _
    $region5: #{tpu_custom_call.1} parent=1 // pred_fallthru
      _
    // Predicated region
    $region6: #{tpu_custom_call.1} parent=1 // pred_check
      _
    $region7: #{tpu_custom_call.1} parent=1 // pred_check_branch
      %14 = sbr.rel (0) target = $region9
    $region8: #{tpu_custom_call.1} parent=1 // pred_region
      _
    $region9: #{tpu_custom_call.1} parent=1 // pred_fallthru
      _
    %v15 = vld [vmem:[%s0] sm:$0xff]
    %v16 = vld [vmem:[%s0 + $0x8] sm:$0xff]
    %v17 = vcvt.s32.f32 %v15
    %v18 = vcvt.s32.f32 %v16
    %v19 = vld [vmem:[%s1] sm:$0x1]
    %21 = vset.pattern.permute.xlu0 0
    %22 = vperm.xlu0 %21, %v17
    %v23 = vpop.permute.xlu0 %22
    %26 = vset.pattern.permute.xlu0 0
    %27 = vperm.xlu0 %26, %v18
    %v28 = vpop.permute.xlu0 %27
    %v31 = vperm.slane %v19, 0
    %v33 = vmul.f32 %v23, %v31
    %v34 = vmul.f32 %v28, %v31
    %v35 = vand.u32 2147483647, %v33
    %vm36 = vcmp.le.f32.partialorder %v35, 0.7853982
    %vm37 = vcmp.lt.s32.totalorder %v33, 0
    %v38 = vand.u32 %v33, 2139095040
    %v39 = vshrl.u32 %v38, 23
    %v40 = vsub.s32 %v39, 127
    %v41 = vand.u32 2147483647, %v33
    %v42 = vand.u32 %v41, 8388607
    %v43 = vor.u32 %v42, 8388608
    %v44 = vsub.s32 0, %v43
    %v45 = vadd.s32 %v40, 1
    %vm46 = vcmp.gt.s32.totalorder %v45, 0
    %v47 = vsel %vm46, %v45, 0
    %v48 = vshrl.u32 %v47, 5
    %v49 = vand.u32 %v47, 31
    %v50 = vsub.s32 32, %v49
    %v51 = vshrl.u32 683565275, %v50
    %v52 = vshll.u32 683565275, %v49
    %v53 = vshrl.u32 2475754826, %v50
    %v54 = vor.u32 %v52, %v53
    %v55 = vshll.u32 2475754826, %v49
    %v56 = vshrl.u32 2131351028, %v50
    %v57 = vor.u32 %v55, %v56
    %v58 = vshll.u32 2131351028, %v49
    %v59 = vshrl.u32 2102212464, %v50
    %v60 = vor.u32 %v58, %v59
    %v61 = vshll.u32 2102212464, %v49
    %v62 = vshrl.u32 920167782, %v50
    %v63 = vor.u32 %v61, %v62
    %v64 = vshll.u32 920167782, %v49
    %v65 = vshrl.u32 1326507024, %v50
    %v66 = vor.u32 %v64, %v65
    %vm67 = vcmp.lt.s32.totalorder %v48, 1
    %vm68 = vcmp.lt.s32.totalorder %v48, 2
    %vm69 = vcmp.lt.s32.totalorder %v48, 3
    %vm70 = vcmp.lt.s32.totalorder %v48, 4
    %v71 = vsel %vm67, %v51, %v54
    %v72 = vsel %vm70, %v60, 2102212464
    %v73 = vsel %vm69, %v57, %v72
    %v74 = vsel %vm68, %v71, %v73
    %v75 = vsel %vm67, %v54, %v57
    %v76 = vsel %vm70, %v63, 920167782
    %v77 = vsel %vm69, %v60, %v76
    %v78 = vsel %vm68, %v75, %v77
    %v79 = vsel %vm67, %v57, %v60
    %v80 = vsel %vm70, %v66, 1326507024
    %v81 = vsel %vm69, %v63, %v80
    %v82 = vsel %vm68, %v79, %v81
    %v83 = vshll.u32 %v43, 8
    %v84 = vand.u32 %v83, 65535
    %v85 = vshrl.u32 %v83, 16
    %v86 = vand.u32 %v82, 65535
    %v87 = vshrl.u32 %v82, 16
    %v88 = vmul.u32 %v84, %v86
    %v89 = vmul.u32 %v84, %v87
    %v90 = vmul.u32 %v85, %v86
    %v91 = vmul.u32 %v85, %v87
    %v92 = vshll.u32 %v89, 16
    %v93 = vshrl.u32 %v89, 16
    %v94 = vshll.u32 %v90, 16
    %v95 = vshrl.u32 %v90, 16
    %vm96 = vc.u32 %v88, %v92
    %v97 = vsel %vm96, 1, 0
    %v98 = vadd.s32 %v88, %v92
    %v99 = vadd.s32 %v91, %v97
    %vm100 = vc.u32 %v98, %v94
    %v101 = vsel %vm100, 1, 0
    %v102 = vadd.s32 %v98, %v94
    %v103 = vadd.s32 %v99, %v101
    %v104 = vadd.s32 %v103, %v93
    %v105 = vadd.s32 %v104, %v95
    %v106 = vand.u32 %v83, 65535
    %v107 = vshrl.u32 %v83, 16
    %v108 = vand.u32 %v78, 65535
    %v109 = vshrl.u32 %v78, 16
    %v110 = vmul.u32 %v106, %v108
    %v111 = vmul.u32 %v106, %v109
    %v112 = vmul.u32 %v107, %v108
    %v113 = vmul.u32 %v107, %v109
    %v114 = vshll.u32 %v111, 16
    %v115 = vshrl.u32 %v111, 16
    %v116 = vshll.u32 %v112, 16
    %v117 = vshrl.u32 %v112, 16
    %vm118 = vc.u32 %v110, %v114
    %v119 = vsel %vm118, 1, 0
    %v120 = vadd.s32 %v110, %v114
    %v121 = vadd.s32 %v113, %v119
    %vm122 = vc.u32 %v120, %v116
    %v123 = vsel %vm122, 1, 0
    %v124 = vadd.s32 %v120, %v116
    %v125 = vadd.s32 %v121, %v123
    %v126 = vadd.s32 %v125, %v115
    %v127 = vadd.s32 %v126, %v117
    %v128 = vmul.u32 %v83, %v74
    %v129 = vadd.s32 %v105, %v124
    %vm130 = vc.u32 %v105, %v124
    %v131 = vadd.s32 %v127, 1
    %v132 = vsel %vm130, %v131, %v127
    %v133 = vadd.s32 %v128, %v132
    %v134 = vadd.s32 %v133, 536870912
    %v135 = vshrl.u32 %v134, 30
    %v136 = vshll.u32 %v135, 30
    %v137 = vsub.s32 %v133, %v136
    %vm138 = vcmp.lt.s32.totalorder %v137, 0
    %v139 = vsub.s32 0, %v137
    %v140 = vsel %vm138, %v139, %v137
    %v141 = vclz %v140
    %v142 = vsub.s32 %v141, 2
    %vm143 = vcmp.gt.s32.totalorder 0, %v142
    %v144 = vsel %vm143, 0, %v142
    %v145 = vsub.s32 32, %v144
    %v146 = vshll.u32 %v137, %v144
    %v147 = vshrl.u32 %v129, %v145
    %v148 = vor.u32 %v146, %v147
    %v149 = vsub.s32 4294967266, %v144
    %v150 = vadd.s32 %v149, 127
    %v151 = vshll.u32 %v150, 23
    %v152 = vor.u32 4788187, %v151
    %v153 = vand.u32 2147483647, %v152
    %v155 = vcvt.s32.f32 %v148
    %v156 = vmul.f32 %v155, %v153
    %v157 = vxor.u32 %v156, 2147483648
    %v158 = vsel %vm37, %v157, %v156
    %v159 = vsub.s32 4, %v135
    %v160 = vsel %vm37, %v159, %v135
    %v161 = vsel %vm36, %v33, %v158
    %v162 = vsel %vm36, 0, %v160
    %v163 = vmul.f32 %v161, %v161
    %v164 = vmul.f32 %v163, -0.001358992
    %v165 = vadd.f32 %v164, 0.041655596
    %v166 = vmul.f32 %v163, %v165
    %v167 = vadd.f32 %v166, -0.4999988
    %v168 = vmul.f32 %v163, %v167
    %v169 = vadd.f32 1.0, %v168
    %v170 = vmul.f32 %v161, %v161
    %v171 = vmul.f32 %v170, -0.00019511016
    %v172 = vadd.f32 %v171, 0.008332121
    %v173 = vmul.f32 %v170, %v172
    %v174 = vadd.f32 %v173, -0.16666654
    %v175 = vmul.f32 %v170, %v174
    %v176 = vadd.f32 %v175, 1.0
    %v177 = vmul.f32 %v176, %v161
    %vm178 = vweird.f32 %v33
    %v179 = vand.u32 %v162, 3
    %vm180 = vcmp.lt.s32.totalorder %v179, 2
    %vm181 = vcmp.eq.s32.totalorder %v179, 0
    %v182 = vxor.u32 %v177, 2147483648
    %v183 = vsel %vm181, %v169, %v182
    %vm184 = vcmp.eq.s32.totalorder %v179, 2
    %v185 = vxor.u32 %v169, 2147483648
    %v186 = vsel %vm184, %v185, %v177
    %v187 = vsel %vm180, %v183, %v186
    %v188 = vsel %vm178, nan, %v187
    %v189 = vand.u32 2147483647, %v34
    %vm190 = vcmp.le.f32.partialorder %v189, 0.7853982
    %vm191 = vcmp.lt.s32.totalorder %v34, 0
    %v192 = vand.u32 %v34, 2139095040
    %v193 = vshrl.u32 %v192, 23
    %v194 = vsub.s32 %v193, 127
    %v195 = vand.u32 2147483647, %v34
    %v196 = vand.u32 %v195, 8388607
    %v197 = vor.u32 %v196, 8388608
    %v198 = vsub.s32 0, %v197
    %v199 = vadd.s32 %v194, 1
    %vm200 = vcmp.gt.s32.totalorder %v199, 0
    %v201 = vsel %vm200, %v199, 0
    %v202 = vshrl.u32 %v201, 5
    %v203 = vand.u32 %v201, 31
    %v204 = vsub.s32 32, %v203
    %v205 = vshrl.u32 683565275, %v204
    %v206 = vshll.u32 683565275, %v203
    %v207 = vshrl.u32 2475754826, %v204
    %v208 = vor.u32 %v206, %v207
    %v209 = vshll.u32 2475754826, %v203
    %v210 = vshrl.u32 2131351028, %v204
    %v211 = vor.u32 %v209, %v210
    %v212 = vshll.u32 2131351028, %v203
    %v213 = vshrl.u32 2102212464, %v204
    %v214 = vor.u32 %v212, %v213
    %v215 = vshll.u32 2102212464, %v203
    %v216 = vshrl.u32 920167782, %v204
    %v217 = vor.u32 %v215, %v216
    %v218 = vshll.u32 920167782, %v203
    %v219 = vshrl.u32 1326507024, %v204
    %v220 = vor.u32 %v218, %v219
    %vm221 = vcmp.lt.s32.totalorder %v202, 1
    %vm222 = vcmp.lt.s32.totalorder %v202, 2
    %vm223 = vcmp.lt.s32.totalorder %v202, 3
    %vm224 = vcmp.lt.s32.totalorder %v202, 4
    %v225 = vsel %vm221, %v205, %v208
    %v226 = vsel %vm224, %v214, 2102212464
    %v227 = vsel %vm223, %v211, %v226
    %v228 = vsel %vm222, %v225, %v227
    %v229 = vsel %vm221, %v208, %v211
    %v230 = vsel %vm224, %v217, 920167782
    %v231 = vsel %vm223, %v214, %v230
    %v232 = vsel %vm222, %v229, %v231
    %v233 = vsel %vm221, %v211, %v214
    %v234 = vsel %vm224, %v220, 1326507024
    %v235 = vsel %vm223, %v217, %v234
    %v236 = vsel %vm222, %v233, %v235
    %v237 = vshll.u32 %v197, 8
    %v238 = vand.u32 %v237, 65535
    %v239 = vshrl.u32 %v237, 16
    %v240 = vand.u32 %v236, 65535
    %v241 = vshrl.u32 %v236, 16
    %v242 = vmul.u32 %v238, %v240
    %v243 = vmul.u32 %v238, %v241
    %v244 = vmul.u32 %v239, %v240
    %v245 = vmul.u32 %v239, %v241
    %v246 = vshll.u32 %v243, 16
    %v247 = vshrl.u32 %v243, 16
    %v248 = vshll.u32 %v244, 16
    %v249 = vshrl.u32 %v244, 16
    %vm250 = vc.u32 %v242, %v246
    %v251 = vsel %vm250, 1, 0
    %v252 = vadd.s32 %v242, %v246
    %v253 = vadd.s32 %v245, %v251
    %vm254 = vc.u32 %v252, %v248
    %v255 = vsel %vm254, 1, 0
    %v256 = vadd.s32 %v252, %v248
    %v257 = vadd.s32 %v253, %v255
    %v258 = vadd.s32 %v257, %v247
    %v259 = vadd.s32 %v258, %v249
    %v260 = vand.u32 %v237, 65535
    %v261 = vshrl.u32 %v237, 16
    %v262 = vand.u32 %v232, 65535
    %v263 = vshrl.u32 %v232, 16
    %v264 = vmul.u32 %v260, %v262
    %v265 = vmul.u32 %v260, %v263
    %v266 = vmul.u32 %v261, %v262
    %v267 = vmul.u32 %v261, %v263
    %v268 = vshll.u32 %v265, 16
    %v269 = vshrl.u32 %v265, 16
    %v270 = vshll.u32 %v266, 16
    %v271 = vshrl.u32 %v266, 16
    %vm272 = vc.u32 %v264, %v268
    %v273 = vsel %vm272, 1, 0
    %v274 = vadd.s32 %v264, %v268
    %v275 = vadd.s32 %v267, %v273
    %vm276 = vc.u32 %v274, %v270
    %v277 = vsel %vm276, 1, 0
    %v278 = vadd.s32 %v274, %v270
    %v279 = vadd.s32 %v275, %v277
    %v280 = vadd.s32 %v279, %v269
    %v281 = vadd.s32 %v280, %v271
    %v282 = vmul.u32 %v237, %v228
    %v283 = vadd.s32 %v259, %v278
    %vm284 = vc.u32 %v259, %v278
    %v285 = vadd.s32 %v281, 1
    %v286 = vsel %vm284, %v285, %v281
    %v287 = vadd.s32 %v282, %v286
    %v288 = vadd.s32 %v287, 536870912
    %v289 = vshrl.u32 %v288, 30
    %v290 = vshll.u32 %v289, 30
    %v291 = vsub.s32 %v287, %v290
    %vm292 = vcmp.lt.s32.totalorder %v291, 0
    %v293 = vsub.s32 0, %v291
    %v294 = vsel %vm292, %v293, %v291
    %v295 = vclz %v294
    %v296 = vsub.s32 %v295, 2
    %vm297 = vcmp.gt.s32.totalorder 0, %v296
    %v298 = vsel %vm297, 0, %v296
    %v299 = vsub.s32 32, %v298
    %v300 = vshll.u32 %v291, %v298
    %v301 = vshrl.u32 %v283, %v299
    %v302 = vor.u32 %v300, %v301
    %v303 = vsub.s32 4294967266, %v298
    %v304 = vadd.s32 %v303, 127
    %v305 = vshll.u32 %v304, 23
    %v306 = vor.u32 4788187, %v305
    %v307 = vand.u32 2147483647, %v306
    %v309 = vcvt.s32.f32 %v302
    %v310 = vmul.f32 %v309, %v307
    %v311 = vxor.u32 %v310, 2147483648
    %v312 = vsel %vm191, %v311, %v310
    %v313 = vsub.s32 4, %v289
    %v314 = vsel %vm191, %v313, %v289
    %v315 = vsel %vm190, %v34, %v312
    %v316 = vsel %vm190, 0, %v314
    %v317 = vmul.f32 %v315, %v315
    %v318 = vmul.f32 %v317, -0.001358992
    %v319 = vadd.f32 %v318, 0.041655596
    %v320 = vmul.f32 %v317, %v319
    %v321 = vadd.f32 %v320, -0.4999988
    %v322 = vmul.f32 %v317, %v321
    %v323 = vadd.f32 1.0, %v322
    %v324 = vmul.f32 %v315, %v315
    %v325 = vmul.f32 %v324, -0.00019511016
    %v326 = vadd.f32 %v325, 0.008332121
    %v327 = vmul.f32 %v324, %v326
    %v328 = vadd.f32 %v327, -0.16666654
    %v329 = vmul.f32 %v324, %v328
    %v330 = vadd.f32 %v329, 1.0
    %v331 = vmul.f32 %v330, %v315
    %vm332 = vweird.f32 %v34
    %v333 = vand.u32 %v316, 3
    %vm334 = vcmp.lt.s32.totalorder %v333, 2
    %vm335 = vcmp.eq.s32.totalorder %v333, 0
    %v336 = vxor.u32 %v331, 2147483648
    %v337 = vsel %vm335, %v323, %v336
    %vm338 = vcmp.eq.s32.totalorder %v333, 2
    %v339 = vxor.u32 %v323, 2147483648
    %v340 = vsel %vm338, %v339, %v331
    %v341 = vsel %vm334, %v337, %v340
    %v342 = vsel %vm332, nan, %v341
    %v343 = vmul.f32 %v188, 1.0693147
    %v344 = vmul.f32 %v342, 1.0693147
    %v345 = vand.u32 2147483647, %v33
    %vm346 = vcmp.le.f32.partialorder %v345, 0.7853982
    %vm347 = vcmp.lt.s32.totalorder %v33, 0
    %v348 = vand.u32 %v33, 2139095040
    %v349 = vshrl.u32 %v348, 23
    %v350 = vsub.s32 %v349, 127
    %v351 = vand.u32 2147483647, %v33
    %v352 = vand.u32 %v351, 8388607
    %v353 = vor.u32 %v352, 8388608
    %v354 = vsub.s32 0, %v353
    %v355 = vadd.s32 %v350, 1
    %vm356 = vcmp.gt.s32.totalorder %v355, 0
    %v357 = vsel %vm356, %v355, 0
    %v358 = vshrl.u32 %v357, 5
    %v359 = vand.u32 %v357, 31
    %v360 = vsub.s32 32, %v359
    %v361 = vshrl.u32 683565275, %v360
    %v362 = vshll.u32 683565275, %v359
    %v363 = vshrl.u32 2475754826, %v360
    %v364 = vor.u32 %v362, %v363
    %v365 = vshll.u32 2475754826, %v359
    %v366 = vshrl.u32 2131351028, %v360
    %v367 = vor.u32 %v365, %v366
    %v368 = vshll.u32 2131351028, %v359
    %v369 = vshrl.u32 2102212464, %v360
    %v370 = vor.u32 %v368, %v369
    %v371 = vshll.u32 2102212464, %v359
    %v372 = vshrl.u32 920167782, %v360
    %v373 = vor.u32 %v371, %v372
    %v374 = vshll.u32 920167782, %v359
    %v375 = vshrl.u32 1326507024, %v360
    %v376 = vor.u32 %v374, %v375
    %vm377 = vcmp.lt.s32.totalorder %v358, 1
    %vm378 = vcmp.lt.s32.totalorder %v358, 2
    %vm379 = vcmp.lt.s32.totalorder %v358, 3
    %vm380 = vcmp.lt.s32.totalorder %v358, 4
    %v381 = vsel %vm377, %v361, %v364
    %v382 = vsel %vm380, %v370, 2102212464
    %v383 = vsel %vm379, %v367, %v382
    %v384 = vsel %vm378, %v381, %v383
    %v385 = vsel %vm377, %v364, %v367
    %v386 = vsel %vm380, %v373, 920167782
    %v387 = vsel %vm379, %v370, %v386
    %v388 = vsel %vm378, %v385, %v387
    %v389 = vsel %vm377, %v367, %v370
    %v390 = vsel %vm380, %v376, 1326507024
    %v391 = vsel %vm379, %v373, %v390
    %v392 = vsel %vm378, %v389, %v391
    %v393 = vshll.u32 %v353, 8
    %v394 = vand.u32 %v393, 65535
    %v395 = vshrl.u32 %v393, 16
    %v396 = vand.u32 %v392, 65535
    %v397 = vshrl.u32 %v392, 16
    %v398 = vmul.u32 %v394, %v396
    %v399 = vmul.u32 %v394, %v397
    %v400 = vmul.u32 %v395, %v396
    %v401 = vmul.u32 %v395, %v397
    %v402 = vshll.u32 %v399, 16
    %v403 = vshrl.u32 %v399, 16
    %v404 = vshll.u32 %v400, 16
    %v405 = vshrl.u32 %v400, 16
    %vm406 = vc.u32 %v398, %v402
    %v407 = vsel %vm406, 1, 0
    %v408 = vadd.s32 %v398, %v402
    %v409 = vadd.s32 %v401, %v407
    %vm410 = vc.u32 %v408, %v404
    %v411 = vsel %vm410, 1, 0
    %v412 = vadd.s32 %v408, %v404
    %v413 = vadd.s32 %v409, %v411
    %v414 = vadd.s32 %v413, %v403
    %v415 = vadd.s32 %v414, %v405
    %v416 = vand.u32 %v393, 65535
    %v417 = vshrl.u32 %v393, 16
    %v418 = vand.u32 %v388, 65535
    %v419 = vshrl.u32 %v388, 16
    %v420 = vmul.u32 %v416, %v418
    %v421 = vmul.u32 %v416, %v419
    %v422 = vmul.u32 %v417, %v418
    %v423 = vmul.u32 %v417, %v419
    %v424 = vshll.u32 %v421, 16
    %v425 = vshrl.u32 %v421, 16
    %v426 = vshll.u32 %v422, 16
    %v427 = vshrl.u32 %v422, 16
    %vm428 = vc.u32 %v420, %v424
    %v429 = vsel %vm428, 1, 0
    %v430 = vadd.s32 %v420, %v424
    %v431 = vadd.s32 %v423, %v429
    %vm432 = vc.u32 %v430, %v426
    %v433 = vsel %vm432, 1, 0
    %v434 = vadd.s32 %v430, %v426
    %v435 = vadd.s32 %v431, %v433
    %v436 = vadd.s32 %v435, %v425
    %v437 = vadd.s32 %v436, %v427
    %v438 = vmul.u32 %v393, %v384
    %v439 = vadd.s32 %v415, %v434
    %vm440 = vc.u32 %v415, %v434
    %v441 = vadd.s32 %v437, 1
    %v442 = vsel %vm440, %v441, %v437
    %v443 = vadd.s32 %v438, %v442
    %v444 = vadd.s32 %v443, 536870912
    %v445 = vshrl.u32 %v444, 30
    %v446 = vshll.u32 %v445, 30
    %v447 = vsub.s32 %v443, %v446
    %vm448 = vcmp.lt.s32.totalorder %v447, 0
    %v449 = vsub.s32 0, %v447
    %v450 = vsel %vm448, %v449, %v447
    %v451 = vclz %v450
    %v452 = vsub.s32 %v451, 2
    %vm453 = vcmp.gt.s32.totalorder 0, %v452
    %v454 = vsel %vm453, 0, %v452
    %v455 = vsub.s32 32, %v454
    %v456 = vshll.u32 %v447, %v454
    %v457 = vshrl.u32 %v439, %v455
    %v458 = vor.u32 %v456, %v457
    %v459 = vsub.s32 4294967266, %v454
    %v460 = vadd.s32 %v459, 127
    %v461 = vshll.u32 %v460, 23
    %v462 = vor.u32 4788187, %v461
    %v463 = vand.u32 2147483647, %v462
    %v465 = vcvt.s32.f32 %v458
    %v466 = vmul.f32 %v465, %v463
    %v467 = vxor.u32 %v466, 2147483648
    %v468 = vsel %vm347, %v467, %v466
    %v469 = vsub.s32 4, %v445
    %v470 = vsel %vm347, %v469, %v445
    %v471 = vsel %vm346, %v33, %v468
    %v472 = vsel %vm346, 0, %v470
    %v473 = vmul.f32 %v471, %v471
    %v474 = vmul.f32 %v473, -0.001358992
    %v475 = vadd.f32 %v474, 0.041655596
    %v476 = vmul.f32 %v473, %v475
    %v477 = vadd.f32 %v476, -0.4999988
    %v478 = vmul.f32 %v473, %v477
    %v479 = vadd.f32 1.0, %v478
    %v480 = vmul.f32 %v471, %v471
    %v481 = vmul.f32 %v480, -0.00019511016
    %v482 = vadd.f32 %v481, 0.008332121
    %v483 = vmul.f32 %v480, %v482
    %v484 = vadd.f32 %v483, -0.16666654
    %v485 = vmul.f32 %v480, %v484
    %v486 = vadd.f32 %v485, 1.0
    %v487 = vmul.f32 %v486, %v471
    %vm488 = vweird.f32 %v33
    %v489 = vadd.s32 %v472, 3
    %v490 = vand.u32 %v489, 3
    %vm491 = vcmp.lt.s32.totalorder %v490, 2
    %vm492 = vcmp.eq.s32.totalorder %v490, 0
    %v493 = vxor.u32 %v487, 2147483648
    %v494 = vsel %vm492, %v479, %v493
    %vm495 = vcmp.eq.s32.totalorder %v490, 2
    %v496 = vxor.u32 %v479, 2147483648
    %v497 = vsel %vm495, %v496, %v487
    %v498 = vsel %vm491, %v494, %v497
    %v499 = vsel %vm488, nan, %v498
    %v500 = vand.u32 2147483647, %v34
    %vm501 = vcmp.le.f32.partialorder %v500, 0.7853982
    %vm502 = vcmp.lt.s32.totalorder %v34, 0
    %v503 = vand.u32 %v34, 2139095040
    %v504 = vshrl.u32 %v503, 23
    %v505 = vsub.s32 %v504, 127
    %v506 = vand.u32 2147483647, %v34
    %v507 = vand.u32 %v506, 8388607
    %v508 = vor.u32 %v507, 8388608
    %v509 = vsub.s32 0, %v508
    %v510 = vadd.s32 %v505, 1
    %vm511 = vcmp.gt.s32.totalorder %v510, 0
    %v512 = vsel %vm511, %v510, 0
    %v513 = vshrl.u32 %v512, 5
    %v514 = vand.u32 %v512, 31
    %v515 = vsub.s32 32, %v514
    %v516 = vshrl.u32 683565275, %v515
    %v517 = vshll.u32 683565275, %v514
    %v518 = vshrl.u32 2475754826, %v515
    %v519 = vor.u32 %v517, %v518
    %v520 = vshll.u32 2475754826, %v514
    %v521 = vshrl.u32 2131351028, %v515
    %v522 = vor.u32 %v520, %v521
    %v523 = vshll.u32 2131351028, %v514
    %v524 = vshrl.u32 2102212464, %v515
    %v525 = vor.u32 %v523, %v524
    %v526 = vshll.u32 2102212464, %v514
    %v527 = vshrl.u32 920167782, %v515
    %v528 = vor.u32 %v526, %v527
    %v529 = vshll.u32 920167782, %v514
    %v530 = vshrl.u32 1326507024, %v515
    %v531 = vor.u32 %v529, %v530
    %vm532 = vcmp.lt.s32.totalorder %v513, 1
    %vm533 = vcmp.lt.s32.totalorder %v513, 2
    %vm534 = vcmp.lt.s32.totalorder %v513, 3
    %vm535 = vcmp.lt.s32.totalorder %v513, 4
    %v536 = vsel %vm532, %v516, %v519
    %v537 = vsel %vm535, %v525, 2102212464
    %v538 = vsel %vm534, %v522, %v537
    %v539 = vsel %vm533, %v536, %v538
    %v540 = vsel %vm532, %v519, %v522
    %v541 = vsel %vm535, %v528, 920167782
    %v542 = vsel %vm534, %v525, %v541
    %v543 = vsel %vm533, %v540, %v542
    %v544 = vsel %vm532, %v522, %v525
    %v545 = vsel %vm535, %v531, 1326507024
    %v546 = vsel %vm534, %v528, %v545
    %v547 = vsel %vm533, %v544, %v546
    %v548 = vshll.u32 %v508, 8
    %v549 = vand.u32 %v548, 65535
    %v550 = vshrl.u32 %v548, 16
    %v551 = vand.u32 %v547, 65535
    %v552 = vshrl.u32 %v547, 16
    %v553 = vmul.u32 %v549, %v551
    %v554 = vmul.u32 %v549, %v552
    %v555 = vmul.u32 %v550, %v551
    %v556 = vmul.u32 %v550, %v552
    %v557 = vshll.u32 %v554, 16
    %v558 = vshrl.u32 %v554, 16
    %v559 = vshll.u32 %v555, 16
    %v560 = vshrl.u32 %v555, 16
    %vm561 = vc.u32 %v553, %v557
    %v562 = vsel %vm561, 1, 0
    %v563 = vadd.s32 %v553, %v557
    %v564 = vadd.s32 %v556, %v562
    %vm565 = vc.u32 %v563, %v559
    %v566 = vsel %vm565, 1, 0
    %v567 = vadd.s32 %v563, %v559
    %v568 = vadd.s32 %v564, %v566
    %v569 = vadd.s32 %v568, %v558
    %v570 = vadd.s32 %v569, %v560
    %v571 = vand.u32 %v548, 65535
    %v572 = vshrl.u32 %v548, 16
    %v573 = vand.u32 %v543, 65535
    %v574 = vshrl.u32 %v543, 16
    %v575 = vmul.u32 %v571, %v573
    %v576 = vmul.u32 %v571, %v574
    %v577 = vmul.u32 %v572, %v573
    %v578 = vmul.u32 %v572, %v574
    %v579 = vshll.u32 %v576, 16
    %v580 = vshrl.u32 %v576, 16
    %v581 = vshll.u32 %v577, 16
    %v582 = vshrl.u32 %v577, 16
    %vm583 = vc.u32 %v575, %v579
    %v584 = vsel %vm583, 1, 0
    %v585 = vadd.s32 %v575, %v579
    %v586 = vadd.s32 %v578, %v584
    %vm587 = vc.u32 %v585, %v581
    %v588 = vsel %vm587, 1, 0
    %v589 = vadd.s32 %v585, %v581
    %v590 = vadd.s32 %v586, %v588
    %v591 = vadd.s32 %v590, %v580
    %v592 = vadd.s32 %v591, %v582
    %v593 = vmul.u32 %v548, %v539
    %v594 = vadd.s32 %v570, %v589
    %vm595 = vc.u32 %v570, %v589
    %v596 = vadd.s32 %v592, 1
    %v597 = vsel %vm595, %v596, %v592
    %v598 = vadd.s32 %v593, %v597
    %v599 = vadd.s32 %v598, 536870912
    %v600 = vshrl.u32 %v599, 30
    %v601 = vshll.u32 %v600, 30
    %v602 = vsub.s32 %v598, %v601
    %vm603 = vcmp.lt.s32.totalorder %v602, 0
    %v604 = vsub.s32 0, %v602
    %v605 = vsel %vm603, %v604, %v602
    %v606 = vclz %v605
    %v607 = vsub.s32 %v606, 2
    %vm608 = vcmp.gt.s32.totalorder 0, %v607
    %v609 = vsel %vm608, 0, %v607
    %v610 = vsub.s32 32, %v609
    %v611 = vshll.u32 %v602, %v609
    %v612 = vshrl.u32 %v594, %v610
    %v613 = vor.u32 %v611, %v612
    %v614 = vsub.s32 4294967266, %v609
    %v615 = vadd.s32 %v614, 127
    %v616 = vshll.u32 %v615, 23
    %v617 = vor.u32 4788187, %v616
    %v618 = vand.u32 2147483647, %v617
    %v620 = vcvt.s32.f32 %v613
    %v621 = vmul.f32 %v620, %v618
    %v622 = vxor.u32 %v621, 2147483648
    %v623 = vsel %vm502, %v622, %v621
    %v624 = vsub.s32 4, %v600
    %v625 = vsel %vm502, %v624, %v600
    %v626 = vsel %vm501, %v34, %v623
    %v627 = vsel %vm501, 0, %v625
    %v628 = vmul.f32 %v626, %v626
    %v629 = vmul.f32 %v628, -0.001358992
    %v630 = vadd.f32 %v629, 0.041655596
    %v631 = vmul.f32 %v628, %v630
    %v632 = vadd.f32 %v631, -0.4999988
    %v633 = vmul.f32 %v628, %v632
    %v634 = vadd.f32 1.0, %v633
    %v635 = vmul.f32 %v626, %v626
    %v636 = vmul.f32 %v635, -0.00019511016
    %v637 = vadd.f32 %v636, 0.008332121
    %v638 = vmul.f32 %v635, %v637
    %v639 = vadd.f32 %v638, -0.16666654
    %v640 = vmul.f32 %v635, %v639
    %v641 = vadd.f32 %v640, 1.0
    %v642 = vmul.f32 %v641, %v626
    %vm643 = vweird.f32 %v34
    %v644 = vadd.s32 %v627, 3
    %v645 = vand.u32 %v644, 3
    %vm646 = vcmp.lt.s32.totalorder %v645, 2
    %vm647 = vcmp.eq.s32.totalorder %v645, 0
    %v648 = vxor.u32 %v642, 2147483648
    %v649 = vsel %vm647, %v634, %v648
    %vm650 = vcmp.eq.s32.totalorder %v645, 2
    %v651 = vxor.u32 %v634, 2147483648
    %v652 = vsel %vm650, %v651, %v642
    %v653 = vsel %vm646, %v649, %v652
    %v654 = vsel %vm643, nan, %v653
    %v655 = vmul.f32 %v499, 1.0693147
    %v656 = vmul.f32 %v654, 1.0693147
    %vm657 = vcmask 130048
    %658 = vst.msk [vmem:[#allocation2] sm:$0xff] %vm657, %v343
    %659 = vst.msk [vmem:[#allocation2 + $0x8] sm:$0xff] %vm657, %v344
    %662 = vrot.lane.b32.xlu0 %v343, 16
    %v663 = vpop.permute.xlu0 %662
    %664 = vrot.lane.b32.xlu0 %v344, 16
    %v665 = vpop.permute.xlu0 %664
    %vm668 = vcmask 261248
    %669 = vst.msk [vmem:[#allocation2] sm:$0xff] %vm668, %v663
    %670 = vst.msk [vmem:[#allocation2 + $0x8] sm:$0xff] %vm668, %v665
    %671 = vst.msk [vmem:[#allocation4] sm:$0xff] %vm657, %v655
    %672 = vst.msk [vmem:[#allocation4 + $0x8] sm:$0xff] %vm657, %v656
    %675 = vrot.lane.b32.xlu0 %v655, 16
    %v676 = vpop.permute.xlu0 %675
    %677 = vrot.lane.b32.xlu0 %v656, 16
    %v678 = vpop.permute.xlu0 %677
    %681 = vst.msk [vmem:[#allocation4] sm:$0xff] %vm668, %v676
    %682 = vst.msk [vmem:[#allocation4 + $0x8] sm:$0xff] %vm668, %v678
    // Predicated region
    $region10: #{tpu_custom_call.1} parent=1 // pred_check
      _
    $region11: #{tpu_custom_call.1} parent=1 // pred_check_branch
      %684 = sbr.rel (0) target = $region13
    $region12: #{tpu_custom_call.1} parent=1 // pred_region
      %686 = vsyncadd [#allocation3], 0
      %s687 = sshll.u32 [#allocation2], 4
      %s688 = int_to_ptr.vmem [resolvable:$true] %s687
      %s689 = sshll.u32 %s2, 4
      %s690 = int_to_ptr.hbm [resolvable:$true] %s689
      %695 = dma.vmem_to_hbm [thread:$0]  %s688, 256, %s690, [#allocation3], 128, 128, 8
    $region13: #{tpu_custom_call.1} parent=1 // pred_fallthru
      _
    // Predicated region
    $region14: #{tpu_custom_call.1} parent=1 // pred_check
      _
    $region15: #{tpu_custom_call.1} parent=1 // pred_check_branch
      %697 = sbr.rel (0) target = $region17
    $region16: #{tpu_custom_call.1} parent=1 // pred_region
      %699 = vsyncadd [#allocation5], 0
      %s700 = sshll.u32 [#allocation4], 4
      %s701 = int_to_ptr.vmem [resolvable:$true] %s700
      %s702 = sshll.u32 %s3, 4
      %s703 = int_to_ptr.hbm [resolvable:$true] %s702
      %708 = dma.vmem_to_hbm [thread:$0]  %s701, 256, %s703, [#allocation5], 128, 128, 8
    $region17: #{tpu_custom_call.1} parent=1 // pred_fallthru
      _
    // Predicated region
    $region18: #{tpu_custom_call.1} parent=1 // pred_check
      _
    $region19: #{tpu_custom_call.1} parent=1 // pred_check_branch
      %710 = sbr.rel (0) target = $region21
    $region20: #{tpu_custom_call.1} parent=1 // pred_region
      %712 = dma.done [#allocation3], 256
    $region21: #{tpu_custom_call.1} parent=1 // pred_fallthru
      _
    // Predicated region
    $region22: #{tpu_custom_call.1} parent=1 // pred_check
      _
    $region23: #{tpu_custom_call.1} parent=1 // pred_check_branch
      %714 = sbr.rel (0) target = $region25
    $region24: #{tpu_custom_call.1} parent=1 // pred_region
      %716 = dma.done [#allocation5], 256
    $region25: #{tpu_custom_call.1} parent=1 // pred_fallthru
      _
    %717 = vsyncpa [#allocation3], 1
    %718 = vsyncpa [#allocation5], 1

</llo_original>
